<compile_context>
chip_gen: v6e
topology: v6e:2x2x1
jax: 0.10.0
libtpu: 0.0.40
codegen_flags: <defaults>
</compile_context>

<pallas_src>
import functools
import math

import jax
import jax.numpy as jnp
from jax.experimental import pallas as pl
from jax.experimental.pallas import tpu as pltpu

PAD = 0


# ---------------------------------------------------------------------------
# In-kernel math helpers (traced inside Pallas kernels)
# ---------------------------------------------------------------------------
def _log_softmax(x):
    m = jnp.max(x, axis=-1, keepdims=True)
    s = x - m
    return s - jnp.log(jnp.sum(jnp.exp(s), axis=-1, keepdims=True))


def _gru_step(x, h, wih, whh, bih, bhh):
    """PyTorch GRUCell / GRU step.

    x, h : [M, E] float32
    wih, whh : [3, E, E] bf16, pre-transposed per gate (order: r, z, n)
    bih, bhh : [3, 1, E] float32
    Matmuls run in bf16 on the MXU with f32 accumulation; gate math is f32.
    """
    xb = x.astype(jnp.bfloat16)
    hb = h.astype(jnp.bfloat16)

    def gx(g):
        return jnp.dot(xb, wih[g], preferred_element_type=jnp.float32) + bih[g]

    def gh(g):
        return jnp.dot(hb, whh[g], preferred_element_type=jnp.float32) + bhh[g]

    r = jax.nn.sigmoid(gx(0) + gh(0))
    z = jax.nn.sigmoid(gx(1) + gh(1))
    n = jnp.tanh(gx(2) + r * gh(2))
    return (1.0 - z) * n + z * h


# ---------------------------------------------------------------------------
# Kernel 1: fused encoder stack.
#   For each batch b, iterate layers l (grid axis, 'arbitrary'):
#     wgt = G_l^T @ h ;  h <- GRUCell(wgt, h)
#   h lives in the (resident) output block across the l axis.
# ---------------------------------------------------------------------------
def _encoder_kernel(gt_ref, emb_ref, wih_ref, whh_ref, bih_ref, bhh_ref, out_ref):
    l = pl.program_id(1)

    @pl.when(l == 0)
    def _():
        out_ref[0] = emb_ref[0]                      # initialize state from embeddings

    h = out_ref[0]                                   # [T, E] f32, resident across layers
    gt = gt_ref[0, 0]                                # [T, T] bf16 (already transposed)
    wgt = jnp.dot(gt, h.astype(jnp.bfloat16), preferred_element_type=jnp.float32)
    h_new = _gru_step(wgt, h, wih_ref[0], whh_ref[0], bih_ref[0], bhh_ref[0])
    out_ref[0] = h_new


def encoder_stack(Gt, emb, wih, whh, bih, bhh):
    B, L, T, _ = Gt.shape
    E = emb.shape[-1]
    return pl.pallas_call(
        _encoder_kernel,
        out_shape=jax.ShapeDtypeStruct((B, T, E), jnp.float32),
        grid=(B, L),
        in_specs=[
            pl.BlockSpec((1, 1, T, T), lambda b, l: (b, l, 0, 0)),
            pl.BlockSpec((1, T, E), lambda b, l: (b, 0, 0)),
            pl.BlockSpec((1, 3, E, E), lambda b, l: (l, 0, 0, 0)),
            pl.BlockSpec((1, 3, E, E), lambda b, l: (l, 0, 0, 0)),
            pl.BlockSpec((1, 3, 1, E), lambda b, l: (l, 0, 0, 0)),
            pl.BlockSpec((1, 3, 1, E), lambda b, l: (l, 0, 0, 0)),
        ],
        out_specs=pl.BlockSpec((1, T, E), lambda b, l: (b, 0, 0)),
        compiler_params=pltpu.CompilerParams(
            dimension_semantics=("parallel", "arbitrary")),
    )(Gt, emb, wih, whh, bih, bhh)


# ---------------------------------------------------------------------------
# Kernel 2: decoder GRU over all context windows, batched.
#   rows = B*(T-D) windows.  h0[row] = input_f[b, t, :] ; xs[d, row] = embedded[b, t+d, :].
#   The recurrence is only over d, so each step is one dense [R, E] x [E, E] matmul
#   per gate.  out[d, row, :] = hidden after step d (lane-dense [R, E] writes).
# ---------------------------------------------------------------------------
def _decoder_kernel(xs_ref, h0_ref, wih_ref, whh_ref, bih_ref, bhh_ref, out_ref, *, D):
    wih = wih_ref[...]
    whh = whh_ref[...]
    bih = bih_ref[...]
    bhh = bhh_ref[...]
    h = h0_ref[...]                                  # [R, E] f32
    for d in range(D):                               # static unroll: D is small
        h = _gru_step(xs_ref[d].astype(jnp.float32), h, wih, whh, bih, bhh)
        out_ref[d] = h.astype(out_ref.dtype)


def decoder_windows(embedded, input_f, wih, whh, bih, bhh, D, row_tile=256):
    B, T, E = embedded.shape
    nw = T - D
    rows = B * nw
    # Gather all windows: row index = b*nw + t.
    h0 = input_f[:, :nw, :].reshape(rows, E)                               # [rows, E] f32
    xs = jnp.stack([embedded[:, d:d + nw, :].reshape(rows, E) for d in range(D)],
                   axis=0).astype(jnp.bfloat16)                            # [D, rows, E]

    R = rows if rows <= row_tile else row_tile                             # row_tile % 8 == 0
    rows_p = ((rows + R - 1) // R) * R
    if rows_p != rows:
        h0 = jnp.pad(h0, ((0, rows_p - rows), (0, 0)))
        xs = jnp.pad(xs, ((0, 0), (0, rows_p - rows), (0, 0)))

    kern = functools.partial(_decoder_kernel, D=D)
    out = pl.pallas_call(
        kern,
        out_shape=jax.ShapeDtypeStruct((D, rows_p, E), jnp.float32),
        grid=(rows_p // R,),
        in_specs=[
            pl.BlockSpec((D, R, E), lambda i: (0, i, 0)),
            pl.BlockSpec((R, E), lambda i: (i, 0)),
            pl.BlockSpec((3, E, E), lambda i: (0, 0, 0)),
            pl.BlockSpec((3, E, E), lambda i: (0, 0, 0)),
            pl.BlockSpec((3, 1, E), lambda i: (0, 0, 0)),
            pl.BlockSpec((3, 1, E), lambda i: (0, 0, 0)),
        ],
        out_specs=pl.BlockSpec((D, R, E), lambda i: (0, i, 0)),
        compiler_params=pltpu.CompilerParams(dimension_semantics=("parallel",)),
    )(xs, h0, wih, whh, bih, bhh)
    return out[:, :rows, :]                                                # [D, rows, E]


# ---------------------------------------------------------------------------
# Kernel 3: AdaptiveLogSoftmaxWithLoss.log_prob -> full [N, V] log-probabilities,
# tiled over N, weights resident, cluster pieces written directly to lane ranges.
# ---------------------------------------------------------------------------
def _adasoft_kernel(h_ref, head_ref, *refs, cutoffs, vocab_sz):
    out_ref = refs[-1]
    tail_refs = refs[:-1]
    hb = h_ref[...].astype(jnp.bfloat16)                                   # [NT, E]
    head_lp = _log_softmax(jnp.dot(hb, head_ref[...],
                                   preferred_element_type=jnp.float32))    # [NT, c0+nc]
    c0 = cutoffs[0]
    edges = list(cutoffs) + [vocab_sz]
    out_ref[:, 0:c0] = head_lp[:, :c0]
    for i in range(len(cutoffs)):
        proj_t = tail_refs[2 * i][...]                                     # [E, hsz] bf16
        out_t = tail_refs[2 * i + 1][...]                                  # [hsz, osz] bf16
        z = jnp.dot(hb, proj_t, preferred_element_type=jnp.float32)
        logits = jnp.dot(z.astype(jnp.bfloat16), out_t,
                         preferred_element_type=jnp.float32)
        out_ref[:, edges[i]:edges[i + 1]] = (_log_softmax(logits)
                                             + head_lp[:, c0 + i:c0 + i + 1])


def adaptive_log_prob(hidden, head_w_t, tail_ws_t, cutoffs, vocab_sz):
    N, E = hidden.shape
    n_head = head_w_t.shape[1]
    flat_tails = [w for pair in tail_ws_t for w in pair]

    # N-tile sizing: keep double-buffered in/out tiles well under VMEM
    # (sized conservatively against v7x's 64 MiB physical / 32 MiB scoped VMEM).
    bytes_per_row = 2 * 4 * (vocab_sz + E)
    nt_cap = max(8, ((8 * 1024 * 1024) // bytes_per_row) // 8 * 8)
    NT = min(nt_cap, 256, N)
    N_p = ((N + NT - 1) // NT) * NT
    h_p = hidden if N_p == N else jnp.pad(hidden, ((0, N_p - N), (0, 0)))

    kern = functools.partial(_adasoft_kernel, cutoffs=tuple(cutoffs), vocab_sz=vocab_sz)
    in_specs = [pl.BlockSpec((NT, E), lambda i: (i, 0)),
                pl.BlockSpec((E, n_head), lambda i: (0, 0))]
    for w in flat_tails:
        in_specs.append(pl.BlockSpec(w.shape, lambda i: (0, 0)))
    out = pl.pallas_call(
        kern,
        out_shape=jax.ShapeDtypeStruct((N_p, vocab_sz), jnp.float32),
        grid=(N_p // NT,),
        in_specs=in_specs,
        out_specs=pl.BlockSpec((NT, vocab_sz), lambda i: (i, 0)),
        compiler_params=pltpu.CompilerParams(dimension_semantics=("parallel",)),
    )(h_p, head_w_t, *flat_tails)
    return out[:N]


# ---------------------------------------------------------------------------
# Glue: parameters, synthetic graph predictor, forward pass
# ---------------------------------------------------------------------------
def xavier_uniform(key, shape):
    fan_out, fan_in = shape
    limit = math.sqrt(6.0 / (fan_in + fan_out))
    return jax.random.uniform(key, shape, jnp.float32, -limit, limit)


def orthogonal(key, shape):
    return jax.nn.initializers.orthogonal()(key, shape, jnp.float32)


def _split_gates_t(w, E):
    """[3E, E] (PyTorch r;z;n layout) -> [3, E_in, E_out] bf16, pre-transposed per gate."""
    return jnp.stack([w[g * E:(g + 1) * E, :].T for g in range(3)], axis=0).astype(jnp.bfloat16)


def init_lm_params(key, vocab_sz, hparams, cutoffs):
    E = hparams['embd_sz']
    L = hparams['n_layers']
    n_clusters = len(cutoffs)
    keys = iter(jax.random.split(key, 5 + 2 * L + 2 * n_clusters))

    emb = jax.random.normal(next(keys), (vocab_sz, E), jnp.float32)
    emb = emb.at[PAD].set(0.0)                       # padding_idx row

    enc_wih, enc_whh = [], []
    for _ in range(L):                               # encoder GRUCells
        enc_wih.append(_split_gates_t(xavier_uniform(next(keys), (3 * E, E)), E))
        enc_whh.append(_split_gates_t(orthogonal(next(keys), (3 * E, E)), E))
    enc_wih = jnp.stack(enc_wih, axis=0)             # [L, 3, E, E] bf16
    enc_whh = jnp.stack(enc_whh, axis=0)
    enc_bih = jnp.zeros((L, 3, 1, E), jnp.float32)   # biases init to 0.0
    enc_bhh = jnp.zeros((L, 3, 1, E), jnp.float32)

    dec_wih = _split_gates_t(xavier_uniform(next(keys), (3 * E, E)), E)   # decoder nn.GRU (1 layer)
    dec_whh = _split_gates_t(orthogonal(next(keys), (3 * E, E)), E)
    dec_bih = jnp.zeros((3, 1, E), jnp.float32)
    dec_bhh = jnp.zeros((3, 1, E), jnp.float32)

    # AdaptiveLogSoftmaxWithLoss(hidden_sz, V, cutoffs, div_val) parameters (no biases).
    _cluster_sz = 5
    div_val = math.log(E / _cluster_sz, len(cutoffs) + 1)
    div_val = min(4.0, math.floor(div_val * 10) / 10)
    head = xavier_uniform(next(keys), (cutoffs[0] + n_clusters, E)).T.astype(jnp.bfloat16)
    edges = list(cutoffs) + [vocab_sz]
    tails = []
    for i in range(n_clusters):
        hsz = int(E // (div_val ** (i + 1)))
        osz = edges[i + 1] - edges[i]
        proj = xavier_uniform(next(keys), (hsz, E)).T.astype(jnp.bfloat16)
        outw = xavier_uniform(next(keys), (osz, hsz)).T.astype(jnp.bfloat16)
        tails.append((proj, outw))

    # Synthetic stand-in for the external graph predictor self.G (class Graph()).
    g_proj = 0.2 * jax.random.normal(next(keys), (L, E, E), jnp.float32)
    return {'emb': emb,
            'enc_wih': enc_wih, 'enc_whh': enc_whh, 'enc_bih': enc_bih, 'enc_bhh': enc_bhh,
            'dec_wih': dec_wih, 'dec_whh': dec_whh, 'dec_bih': dec_bih, 'dec_bhh': dec_bhh,
            'head': head, 'tails': tails, 'g_proj': g_proj}


def graph_predict(embedded, mask, g_proj):
    """Stand-in for the external Graph() module: per-layer bilinear attention,
    masked and softmax-normalized over the key axis.  Returns G already TRANSPOSED
    on the last two axes (and cast to bf16) so the encoder kernel can use a plain dot."""
    E = embedded.shape[-1]
    q = jnp.einsum('bte,lef->bltf', embedded, g_proj)
    scores = jnp.einsum('bltf,bsf->blts', q, embedded) / math.sqrt(E)
    scores = jnp.where(mask[:, None, :, :] > 0, scores, -1e9)   # f32-safe mask fill
    G = jax.nn.softmax(scores, axis=-1)                         # [B, L, T, T]
    return jnp.swapaxes(G, -1, -2).astype(jnp.bfloat16)         # [B, L, T, T] = G^T


def lm_forward(params, x, lengths, hparams, cutoffs, vocab_sz):
    """output_probs=True path of LM.forward, p_ss == 0, all sequences full length."""
    B, T = x.shape
    E = hparams['embd_sz']
    D = hparams['Feature']['context_sz']
    nw = T - D

    # emb lookup + dropout (eval mode -> identity);  embedded = input_f.clone()
    input_f = params['emb'][x]                                   # [B, T, E] f32
    embedded = input_f
    mask = ((x != PAD)[:, :, None] & (x != PAD)[:, None, :]).astype(jnp.float32)
    Gt = graph_predict(embedded, mask, params['g_proj'])         # [B, L, T, T] bf16 (transposed)

    # fused encoder stack: h <- GRUCell(G_l^T @ h, h), layer state resident in VMEM
    enc_out = encoder_stack(Gt, embedded, params['enc_wih'], params['enc_whh'],
                            params['enc_bih'], params['enc_bhh'])

    # decoder GRU over all context windows, batched into dense [B*(T-D), E] matmuls
    # TODO(synk): variable-length pack_padded_sequence / -inf padding of short batches
    # is not reproduced; all sequences are assumed full length (lens == D every window).
    dec_out = decoder_windows(embedded, enc_out, params['dec_wih'], params['dec_whh'],
                              params['dec_bih'], params['dec_bhh'], D)   # [D, B*nw, E]

    # adaptive log-softmax log_prob over all decoder outputs
    # torch.cat(logprobs, dim=1): row (b, t*D + d) -> flat row (b*nw + t)*D + d
    flat = jnp.transpose(dec_out, (1, 0, 2)).reshape(B * nw * D, E)
    logp = adaptive_log_prob(flat, params['head'], params['tails'], cutoffs, vocab_sz)
    return logp.reshape(B, nw * D, vocab_sz)


if __name__ == "__main__":
    vocab_sz = 40
    cutoffs = [10, 20]
    hparams = {
        'dropout': 0.1,
        'embd_sz': 32,
        'n_layers': 2,
        'Feature': {'compose_fn': 'GRUCell', 'SS_prob': 0.0, 'context_sz': 3},
    }
    B, T = 2, 8

    key = jax.random.PRNGKey(0)
    pkey, xkey = jax.random.split(key)
    params = init_lm_params(pkey, vocab_sz, hparams, cutoffs)
    # tokens in [1, V) so there is no PAD -> full-length sequences
    x = jax.random.randint(xkey, (B, T), 1, vocab_sz, dtype=jnp.int32)
    lengths = jnp.full((B,), T, dtype=jnp.int32)

    out = lm_forward(params, x, lengths, hparams, cutoffs, vocab_sz)
    out = jax.block_until_ready(out)
    D = hparams['Feature']['context_sz']
    assert out.shape == (B, (T - D) * D, vocab_sz), out.shape
    assert bool(jnp.all(jnp.isfinite(out)))
    print("KERNEL_OK")
</pallas_src>

<mosaic_0001>
module attributes {stable_mosaic.version = 11 : i64} {
  func.func @_encoder_kernel(%arg0: i32, %arg1: i32, %arg2: memref<1x1x8x8xbf16, #tpu.memory_space<vmem>>, %arg3: memref<1x8x32xf32, #tpu.memory_space<vmem>>, %arg4: memref<1x3x32x32xbf16, #tpu.memory_space<vmem>>, %arg5: memref<1x3x32x32xbf16, #tpu.memory_space<vmem>>, %arg6: memref<1x3x1x32xf32, #tpu.memory_space<vmem>>, %arg7: memref<1x3x1x32xf32, #tpu.memory_space<vmem>>, %arg8: memref<1x8x32xf32, #tpu.memory_space<vmem>>) attributes {dimension_semantics = [#tpu.dimension_semantics<parallel>, #tpu.dimension_semantics<arbitrary>], iteration_bounds = array<i64: 2, 2>, scalar_prefetch = 0 : i64, scratch_operands = 0 : i64, tpu.core_type = #tpu.core_type<tc>, window_params = [{transform_indices = @transform_0, window_bounds = array<i64: 1, 1, 8, 8>}, {transform_indices = @transform_1, window_bounds = array<i64: 1, 8, 32>}, {transform_indices = @transform_2, window_bounds = array<i64: 1, 3, 32, 32>}, {transform_indices = @transform_3, window_bounds = array<i64: 1, 3, 32, 32>}, {transform_indices = @transform_4, window_bounds = array<i64: 1, 3, 1, 32>}, {transform_indices = @transform_5, window_bounds = array<i64: 1, 3, 1, 32>}, {transform_indices = @transform_6, window_bounds = array<i64: 1, 8, 32>}]} {
    %c0_i32 = arith.constant 0 : i32
    %0 = arith.cmpi eq, %arg1, %c0_i32 : i32
    %1 = arith.extui %0 : i1 to i32
    %c0_i32_0 = arith.constant 0 : i32
    %2 = arith.cmpi ne, %1, %c0_i32_0 : i32
    scf.if %2 {
      %c0_35 = arith.constant 0 : index
      %c0_36 = arith.constant 0 : index
      %c0_37 = arith.constant 0 : index
      %84 = vector.load %arg3[%c0_35, %c0_36, %c0_37] : memref<1x8x32xf32, #tpu.memory_space<vmem>>, vector<1x8x32xf32>
      %85 = vector.shape_cast %84 : vector<1x8x32xf32> to vector<8x32xf32>
      %c0_38 = arith.constant 0 : index
      %c0_39 = arith.constant 0 : index
      %c0_40 = arith.constant 0 : index
      %86 = vector.load %arg8[%c0_38, %c0_39, %c0_40] : memref<1x8x32xf32, #tpu.memory_space<vmem>>, vector<1x8x32xf32>
      %87 = vector.shape_cast %86 : vector<1x8x32xf32> to vector<8x32xf32>
      %88 = vector.shape_cast %85 : vector<8x32xf32> to vector<1x8x32xf32>
      tpu.vector_store %arg8[%c0_38, %c0_39, %c0_40], %88 {strides = array<i32>} : memref<1x8x32xf32, #tpu.memory_space<vmem>>, vector<1x8x32xf32>,
    } else {
    }
    %c0 = arith.constant 0 : index
    %c0_1 = arith.constant 0 : index
    %c0_2 = arith.constant 0 : index
    %3 = vector.load %arg8[%c0, %c0_1, %c0_2] : memref<1x8x32xf32, #tpu.memory_space<vmem>>, vector<1x8x32xf32>
    %4 = vector.shape_cast %3 : vector<1x8x32xf32> to vector<8x32xf32>
    %c0_3 = arith.constant 0 : index
    %c0_4 = arith.constant 0 : index
    %c0_5 = arith.constant 0 : index
    %c0_6 = arith.constant 0 : index
    %5 = vector.load %arg2[%c0_3, %c0_4, %c0_5, %c0_6] : memref<1x1x8x8xbf16, #tpu.memory_space<vmem>>, vector<1x1x8x8xbf16>
    %6 = vector.shape_cast %5 : vector<1x1x8x8xbf16> to vector<8x8xbf16>
    %7 = arith.truncf %4 : vector<8x32xf32> to vector<8x32xbf16>
    %cst = arith.constant dense<0.000000e+00> : vector<8x32xf32>
    %8 = tpu.matmul %6, %7, %cst {dimension_numbers = #tpu.dot_dimension_numbers<[1], [0], [0], [1], [0, 0, 1, 1], [], []>} : vector<8x8xbf16>, vector<8x32xbf16>, vector<8x32xf32> -> vector<8x32xf32>
    %c0_7 = arith.constant 0 : index
    %c0_8 = arith.constant 0 : index
    %c0_9 = arith.constant 0 : index
    %c0_10 = arith.constant 0 : index
    %9 = vector.load %arg4[%c0_7, %c0_8, %c0_9, %c0_10] : memref<1x3x32x32xbf16, #tpu.memory_space<vmem>>, vector<1x3x32x32xbf16>
    %10 = vector.shape_cast %9 : vector<1x3x32x32xbf16> to vector<3x32x32xbf16>
    %c0_11 = arith.constant 0 : index
    %c0_12 = arith.constant 0 : index
    %c0_13 = arith.constant 0 : index
    %c0_14 = arith.constant 0 : index
    %11 = vector.load %arg5[%c0_11, %c0_12, %c0_13, %c0_14] : memref<1x3x32x32xbf16, #tpu.memory_space<vmem>>, vector<1x3x32x32xbf16>
    %12 = vector.shape_cast %11 : vector<1x3x32x32xbf16> to vector<3x32x32xbf16>
    %c0_15 = arith.constant 0 : index
    %c0_16 = arith.constant 0 : index
    %c0_17 = arith.constant 0 : index
    %c0_18 = arith.constant 0 : index
    %13 = vector.load %arg6[%c0_15, %c0_16, %c0_17, %c0_18] : memref<1x3x1x32xf32, #tpu.memory_space<vmem>>, vector<1x3x1x32xf32>
    %14 = vector.shape_cast %13 : vector<1x3x1x32xf32> to vector<3x1x32xf32>
    %c0_19 = arith.constant 0 : index
    %c0_20 = arith.constant 0 : index
    %c0_21 = arith.constant 0 : index
    %c0_22 = arith.constant 0 : index
    %15 = vector.load %arg7[%c0_19, %c0_20, %c0_21, %c0_22] : memref<1x3x1x32xf32, #tpu.memory_space<vmem>>, vector<1x3x1x32xf32>
    %16 = vector.shape_cast %15 : vector<1x3x1x32xf32> to vector<3x1x32xf32>
    %17 = arith.truncf %8 : vector<8x32xf32> to vector<8x32xbf16>
    %18 = arith.truncf %4 : vector<8x32xf32> to vector<8x32xbf16>
    %19 = vector.extract_strided_slice %10 {offsets = [0, 0, 0], sizes = [1, 32, 32], strides = [1, 1, 1]} : vector<3x32x32xbf16> to vector<1x32x32xbf16>
    %20 = vector.shape_cast %19 : vector<1x32x32xbf16> to vector<32x32xbf16>
    %cst_23 = arith.constant dense<0.000000e+00> : vector<8x32xf32>
    %21 = tpu.matmul %17, %20, %cst_23 {dimension_numbers = #tpu.dot_dimension_numbers<[1], [0], [0], [1], [0, 0, 1, 1], [], []>} : vector<8x32xbf16>, vector<32x32xbf16>, vector<8x32xf32> -> vector<8x32xf32>
    %22 = vector.extract_strided_slice %14 {offsets = [0, 0, 0], sizes = [1, 1, 32], strides = [1, 1, 1]} : vector<3x1x32xf32> to vector<1x1x32xf32>
    %23 = vector.shape_cast %22 : vector<1x1x32xf32> to vector<1x32xf32>
    %24 = vector.broadcast %23 : vector<1x32xf32> to vector<8x32xf32>
    %25 = arith.addf %21, %24 : vector<8x32xf32>
    %26 = vector.extract_strided_slice %12 {offsets = [0, 0, 0], sizes = [1, 32, 32], strides = [1, 1, 1]} : vector<3x32x32xbf16> to vector<1x32x32xbf16>
    %27 = vector.shape_cast %26 : vector<1x32x32xbf16> to vector<32x32xbf16>
    %cst_24 = arith.constant dense<0.000000e+00> : vector<8x32xf32>
    %28 = tpu.matmul %18, %27, %cst_24 {dimension_numbers = #tpu.dot_dimension_numbers<[1], [0], [0], [1], [0, 0, 1, 1], [], []>} : vector<8x32xbf16>, vector<32x32xbf16>, vector<8x32xf32> -> vector<8x32xf32>
    %29 = vector.extract_strided_slice %16 {offsets = [0, 0, 0], sizes = [1, 1, 32], strides = [1, 1, 1]} : vector<3x1x32xf32> to vector<1x1x32xf32>
    %30 = vector.shape_cast %29 : vector<1x1x32xf32> to vector<1x32xf32>
    %31 = vector.broadcast %30 : vector<1x32xf32> to vector<8x32xf32>
    %32 = arith.addf %28, %31 : vector<8x32xf32>
    %33 = arith.addf %25, %32 : vector<8x32xf32>
    %34 = arith.negf %33 : vector<8x32xf32>
    %35 = math.exp %34 : vector<8x32xf32>
    %cst_25 = arith.constant 1.000000e+00 : f32
    %36 = vector.broadcast %cst_25 : f32 to vector<8x32xf32>
    %37 = arith.addf %36, %35 : vector<8x32xf32>
    %38 = arith.divf %36, %37 : vector<8x32xf32>
    %39 = vector.extract_strided_slice %10 {offsets = [1, 0, 0], sizes = [1, 32, 32], strides = [1, 1, 1]} : vector<3x32x32xbf16> to vector<1x32x32xbf16>
    %40 = vector.shape_cast %39 : vector<1x32x32xbf16> to vector<32x32xbf16>
    %cst_26 = arith.constant dense<0.000000e+00> : vector<8x32xf32>
    %41 = tpu.matmul %17, %40, %cst_26 {dimension_numbers = #tpu.dot_dimension_numbers<[1], [0], [0], [1], [0, 0, 1, 1], [], []>} : vector<8x32xbf16>, vector<32x32xbf16>, vector<8x32xf32> -> vector<8x32xf32>
    %42 = vector.extract_strided_slice %14 {offsets = [1, 0, 0], sizes = [1, 1, 32], strides = [1, 1, 1]} : vector<3x1x32xf32> to vector<1x1x32xf32>
    %43 = vector.shape_cast %42 : vector<1x1x32xf32> to vector<1x32xf32>
    %44 = vector.broadcast %43 : vector<1x32xf32> to vector<8x32xf32>
    %45 = arith.addf %41, %44 : vector<8x32xf32>
    %46 = vector.extract_strided_slice %12 {offsets = [1, 0, 0], sizes = [1, 32, 32], strides = [1, 1, 1]} : vector<3x32x32xbf16> to vector<1x32x32xbf16>
    %47 = vector.shape_cast %46 : vector<1x32x32xbf16> to vector<32x32xbf16>
    %cst_27 = arith.constant dense<0.000000e+00> : vector<8x32xf32>
    %48 = tpu.matmul %18, %47, %cst_27 {dimension_numbers = #tpu.dot_dimension_numbers<[1], [0], [0], [1], [0, 0, 1, 1], [], []>} : vector<8x32xbf16>, vector<32x32xbf16>, vector<8x32xf32> -> vector<8x32xf32>
    %49 = vector.extract_strided_slice %16 {offsets = [1, 0, 0], sizes = [1, 1, 32], strides = [1, 1, 1]} : vector<3x1x32xf32> to vector<1x1x32xf32>
    %50 = vector.shape_cast %49 : vector<1x1x32xf32> to vector<1x32xf32>
    %51 = vector.broadcast %50 : vector<1x32xf32> to vector<8x32xf32>
    %52 = arith.addf %48, %51 : vector<8x32xf32>
    %53 = arith.addf %45, %52 : vector<8x32xf32>
    %54 = arith.negf %53 : vector<8x32xf32>
    %55 = math.exp %54 : vector<8x32xf32>
    %cst_28 = arith.constant 1.000000e+00 : f32
    %56 = vector.broadcast %cst_28 : f32 to vector<8x32xf32>
    %57 = arith.addf %56, %55 : vector<8x32xf32>
    %58 = arith.divf %56, %57 : vector<8x32xf32>
    %59 = vector.extract_strided_slice %10 {offsets = [2, 0, 0], sizes = [1, 32, 32], strides = [1, 1, 1]} : vector<3x32x32xbf16> to vector<1x32x32xbf16>
    %60 = vector.shape_cast %59 : vector<1x32x32xbf16> to vector<32x32xbf16>
    %cst_29 = arith.constant dense<0.000000e+00> : vector<8x32xf32>
    %61 = tpu.matmul %17, %60, %cst_29 {dimension_numbers = #tpu.dot_dimension_numbers<[1], [0], [0], [1], [0, 0, 1, 1], [], []>} : vector<8x32xbf16>, vector<32x32xbf16>, vector<8x32xf32> -> vector<8x32xf32>
    %62 = vector.extract_strided_slice %14 {offsets = [2, 0, 0], sizes = [1, 1, 32], strides = [1, 1, 1]} : vector<3x1x32xf32> to vector<1x1x32xf32>
    %63 = vector.shape_cast %62 : vector<1x1x32xf32> to vector<1x32xf32>
    %64 = vector.broadcast %63 : vector<1x32xf32> to vector<8x32xf32>
    %65 = arith.addf %61, %64 : vector<8x32xf32>
    %66 = vector.extract_strided_slice %12 {offsets = [2, 0, 0], sizes = [1, 32, 32], strides = [1, 1, 1]} : vector<3x32x32xbf16> to vector<1x32x32xbf16>
    %67 = vector.shape_cast %66 : vector<1x32x32xbf16> to vector<32x32xbf16>
    %cst_30 = arith.constant dense<0.000000e+00> : vector<8x32xf32>
    %68 = tpu.matmul %18, %67, %cst_30 {dimension_numbers = #tpu.dot_dimension_numbers<[1], [0], [0], [1], [0, 0, 1, 1], [], []>} : vector<8x32xbf16>, vector<32x32xbf16>, vector<8x32xf32> -> vector<8x32xf32>
    %69 = vector.extract_strided_slice %16 {offsets = [2, 0, 0], sizes = [1, 1, 32], strides = [1, 1, 1]} : vector<3x1x32xf32> to vector<1x1x32xf32>
    %70 = vector.shape_cast %69 : vector<1x1x32xf32> to vector<1x32xf32>
    %71 = vector.broadcast %70 : vector<1x32xf32> to vector<8x32xf32>
    %72 = arith.addf %68, %71 : vector<8x32xf32>
    %73 = arith.mulf %38, %72 : vector<8x32xf32>
    %74 = arith.addf %65, %73 : vector<8x32xf32>
    %75 = math.tanh %74 : vector<8x32xf32>
    %cst_31 = arith.constant 1.000000e+00 : f32
    %76 = vector.broadcast %cst_31 : f32 to vector<8x32xf32>
    %77 = arith.subf %76, %58 : vector<8x32xf32>
    %78 = arith.mulf %77, %75 : vector<8x32xf32>
    %79 = arith.mulf %58, %4 : vector<8x32xf32>
    %80 = arith.addf %78, %79 : vector<8x32xf32>
    %c0_32 = arith.constant 0 : index
    %c0_33 = arith.constant 0 : index
    %c0_34 = arith.constant 0 : index
    %81 = vector.load %arg8[%c0_32, %c0_33, %c0_34] : memref<1x8x32xf32, #tpu.memory_space<vmem>>, vector<1x8x32xf32>
    %82 = vector.shape_cast %81 : vector<1x8x32xf32> to vector<8x32xf32>
    %83 = vector.shape_cast %80 : vector<8x32xf32> to vector<1x8x32xf32>
    tpu.vector_store %arg8[%c0_32, %c0_33, %c0_34], %83 {strides = array<i32>} : memref<1x8x32xf32, #tpu.memory_space<vmem>>, vector<1x8x32xf32>,
    return
  }
  func.func @transform_0(%arg0: i32, %arg1: i32) -> (i32, i32, i32, i32) {
    %c0_i32 = arith.constant 0 : i32
    %c0_i32_0 = arith.constant 0 : i32
    %c0_i32_1 = arith.constant 0 : i32
    return %arg0, %arg1, %c0_i32, %c0_i32_0 : i32, i32, i32, i32
  }
  func.func @transform_1(%arg0: i32, %arg1: i32) -> (i32, i32, i32) {
    %c0_i32 = arith.constant 0 : i32
    %c0_i32_0 = arith.constant 0 : i32
    %c0_i32_1 = arith.constant 0 : i32
    return %arg0, %c0_i32, %c0_i32_0 : i32, i32, i32
  }
  func.func @transform_2(%arg0: i32, %arg1: i32) -> (i32, i32, i32, i32) {
    %c0_i32 = arith.constant 0 : i32
    %c0_i32_0 = arith.constant 0 : i32
    %c0_i32_1 = arith.constant 0 : i32
    %c0_i32_2 = arith.constant 0 : i32
    return %arg1, %c0_i32, %c0_i32_0, %c0_i32_1 : i32, i32, i32, i32
  }
  func.func @transform_3(%arg0: i32, %arg1: i32) -> (i32, i32, i32, i32) {
    %c0_i32 = arith.constant 0 : i32
    %c0_i32_0 = arith.constant 0 : i32
    %c0_i32_1 = arith.constant 0 : i32
    %c0_i32_2 = arith.constant 0 : i32
    return %arg1, %c0_i32, %c0_i32_0, %c0_i32_1 : i32, i32, i32, i32
  }
  func.func @transform_4(%arg0: i32, %arg1: i32) -> (i32, i32, i32, i32) {
    %c0_i32 = arith.constant 0 : i32
    %c0_i32_0 = arith.constant 0 : i32
    %c0_i32_1 = arith.constant 0 : i32
    %c0_i32_2 = arith.constant 0 : i32
    return %arg1, %c0_i32, %c0_i32_0, %c0_i32_1 : i32, i32, i32, i32
  }
  func.func @transform_5(%arg0: i32, %arg1: i32) -> (i32, i32, i32, i32) {
    %c0_i32 = arith.constant 0 : i32
    %c0_i32_0 = arith.constant 0 : i32
    %c0_i32_1 = arith.constant 0 : i32
    %c0_i32_2 = arith.constant 0 : i32
    return %arg1, %c0_i32, %c0_i32_0, %c0_i32_1 : i32, i32, i32, i32
  }
  func.func @transform_6(%arg0: i32, %arg1: i32) -> (i32, i32, i32) {
    %c0_i32 = arith.constant 0 : i32
    %c0_i32_0 = arith.constant 0 : i32
    %c0_i32_1 = arith.constant 0 : i32
    return %arg0, %c0_i32, %c0_i32_0 : i32, i32, i32
  }
}

</mosaic_0001>

<llo_original>
// kernel: tpu_custom_call.1
$region0: #{tpu_custom_call.1}
  #allocation0 [shape = 'u32[]', space=smem, size = 0x4, offset = 0x4, fixed_abs, tag = 'smem constant byte address 0x4 - core index']
  #allocation1 [shape = 'u32[144,128]{1,0:T(1,128)}', space=vmem, size = 0x12000, scoped, tag = 'internal scratch']
  %s0 = inlined_call_operand.hbm [shape: bf16[2,2,8,8], index: 0, kind: input, shape index: {}]
  %s1 = inlined_call_operand.hbm [shape: f32[2,8,32], index: 1, kind: input, shape index: {}]
  %s2 = inlined_call_operand.hbm [shape: bf16[2,3,32,32], index: 2, kind: input, shape index: {}]
  %s3 = inlined_call_operand.hbm [shape: bf16[2,3,32,32], index: 3, kind: input, shape index: {}]
  %s4 = inlined_call_operand.vmem [shape: f32[2,3,1,32], index: 4, kind: input, shape index: {}]
  %s5 = inlined_call_operand.hbm [shape: f32[2,3,1,32], index: 5, kind: input, shape index: {}]
  %s6 = inlined_call_operand.hbm [shape: f32[2,8,32], index: 6, kind: output, shape index: {}]
  %s7 = sld [smem:[#allocation0]]
  $region81: #{tpu_custom_call.1} parent=0
    _
  %s9 = ssub.s32 1, %s7
  %s10 = scalar_select 0, %s9, %s7
  $region1: #{tpu_custom_call.1} parent=0
    #allocation2 [shape = 'u8[4096]{0}', space=vmem, size = 0x1000, scoped, tag = 'input window, operand 0']
    #allocation3 [shape = 's32[2]{0}', space=sflag, size = 0x8, scoped, tag = 'scoped memory for tpu_custom_call.1']
    #allocation4 [shape = 's32[2]{0}', space=sflag, size = 0x8, scoped, tag = 'scoped memory for tpu_custom_call.1']
    #allocation5 [shape = 'u8[8192]{0}', space=vmem, size = 0x2000, scoped, tag = 'input window, operand 1']
    #allocation6 [shape = 's32[2]{0}', space=sflag, size = 0x8, scoped, tag = 'scoped memory for tpu_custom_call.1']
    #allocation7 [shape = 'u8[49152]{0}', space=vmem, size = 0xc000, scoped, tag = 'input window, operand 2']
    #allocation8 [shape = 'u8[49152]{0}', space=vmem, size = 0xc000, scoped, tag = 'input window, operand 3']
    #allocation9 [shape = 's32[2]{0}', space=sflag, size = 0x8, scoped, tag = 'scoped memory for tpu_custom_call.1']
    #allocation10 [shape = 'u8[3072]{0}', space=vmem, size = 0xc00, scoped, tag = 'input window, operand 5']
    #allocation11 [shape = 'u8[8192]{0}', space=vmem, size = 0x2000, scoped, tag = 'output window, operand 0']
    %11 = vsyncpa [#allocation3], 0
    %s12 = scalar_lea.sflag [#allocation3], 1
    %13 = vsyncpa %s12, 0
    %14 = vsyncpa [#allocation6], 0
    %s15 = scalar_lea.sflag [#allocation6], 1
    %16 = vsyncpa %s15, 0
    %17 = vsyncpa [#allocation9], 0
    %s18 = scalar_lea.sflag [#allocation9], 1
    %19 = vsyncpa %s18, 0
    %20 = vsyncpa [#allocation4], 0
    %s21 = scalar_lea.sflag [#allocation4], 1
    %22 = vsyncpa %s21, 0
    loop: start=0, step=1, limit=6
    $region2: #{tpu_custom_call.1} parent=1 // loop_pre_header
      _
    $region3: #{tpu_custom_call.1} parent=1 // loop_header
      %s24 = sphi 0, %s28
      %p25 = scmp.ge.s32.totalorder %s24, 6
      %s31 = sphi 0, %s43
      %s32 = sphi 0, %s39
      %s33 = sphi 0, %s31
      %s34 = sphi 0, %s32
      %s35 = sphi 0, %s33
      %s36 = sphi 0, %s34
      %s48 = sphi 0, %s50
      %s51 = sphi 0, %s48
      %s52 = sphi 0, %s51
      %s68 = sphi 0, %s52
      %s74 = sphi 0, %s76
      %s77 = sphi 0, %s74
      %s78 = sphi 0, %s77
      %s94 = sphi 0, %s78
      %s100 = sphi 0, %s102
      %s103 = sphi 0, %s100
      %s104 = sphi 0, %s103
      %s120 = sphi 0, %s104
      %s126 = sphi 0, %s128
      %s129 = sphi 0, %s126
      %s130 = sphi 0, %s129
      %s146 = sphi 0, %s130
      %s152 = sphi 0, %s154
      %s155 = sphi 0, %s152
      %s156 = sphi 0, %s155
      %s172 = sphi 0, %s156
      %s178 = sphi 0, %s180
      %s181 = sphi 0, %s178
      %s182 = sphi 0, %s181
      %s198 = sphi 0, %s182
      %s204 = sphi 0, %s206
      %s207 = sphi 0, %s204
      %s208 = sphi 0, %s207
      %s224 = sphi 0, %s208
    $region4: #{tpu_custom_call.1} parent=1 // loop_header_branch
      %27 = sbr.rel (%p25) target = $region8
    $region5: #{tpu_custom_call.1} parent=1 // loop_body
      %s29 = ssub.s32 %s24, 1
      %s30 = ssub.s32 %s24, 2
      %s37 = sadd.s32 1, %s32
      %p38 = scmp.ge.s32.totalorder %s37, 2
      %s39 = scalar_select %p38, 0, %s37
      %s40 = sadd.s32 1, %s31
      %s41 = scalar_select %p38, %s40, %s31
      %p42 = scmp.ge.s32.totalorder %s41, 2
      %s43 = scalar_select %p42, 0, %s41
      %s44 = ssub.s32 %s31, %s43
      %s45 = ssub.s32 %s32, %s39
      %s46 = sor.u32 %s44, %s45
      %p47 = scmp.eq.s32.totalorder %s46, 0
      %s49 = sadd.s32 %s48, 1
      %s50 = scalar_select %p47, %s48, %s49
      %p53 = pneg %p47
      %p54 = scmp.eq.s32.totalorder %s24, 3
      %p55 = por %p53, %p54
      %p56 = scmp.ne.s32.totalorder %s48, %s51
      %p57 = scmp.eq.s32.totalorder %s24, 0
      %p58 = por %p56, %p57
      %p59 = scmp.ne.s32.totalorder %s48, %s51
      %p60 = scmp.eq.s32.totalorder %s29, 3
      %p61 = por %p59, %p60
      %p62 = scmp.ne.s32.totalorder %s51, %s52
      %p63 = scmp.eq.s32.totalorder %s29, 0
      %p64 = por %p62, %p63
      %p65 = scmp.ne.s32.totalorder %s51, %s52
      %p66 = scmp.eq.s32.totalorder %s30, 3
      %p67 = por %p65, %p66
      %p69 = scmp.ne.s32.totalorder %s52, %s68
      %p70 = scmp.eq.s32.totalorder %s30, 0
      %p71 = por %p69, %p70
      %s72 = ssub.s32 %s31, %s43
      %p73 = scmp.eq.s32.totalorder %s72, 0
      %s75 = sadd.s32 %s74, 1
      %s76 = scalar_select %p73, %s74, %s75
      %p79 = pneg %p73
      %p80 = scmp.eq.s32.totalorder %s24, 3
      %p81 = por %p79, %p80
      %p82 = scmp.ne.s32.totalorder %s74, %s77
      %p83 = scmp.eq.s32.totalorder %s24, 0
      %p84 = por %p82, %p83
      %p85 = scmp.ne.s32.totalorder %s74, %s77
      %p86 = scmp.eq.s32.totalorder %s29, 3
      %p87 = por %p85, %p86
      %p88 = scmp.ne.s32.totalorder %s77, %s78
      %p89 = scmp.eq.s32.totalorder %s29, 0
      %p90 = por %p88, %p89
      %p91 = scmp.ne.s32.totalorder %s77, %s78
      %p92 = scmp.eq.s32.totalorder %s30, 3
      %p93 = por %p91, %p92
      %p95 = scmp.ne.s32.totalorder %s78, %s94
      %p96 = scmp.eq.s32.totalorder %s30, 0
      %p97 = por %p95, %p96
      %s98 = ssub.s32 %s32, %s39
      %p99 = scmp.eq.s32.totalorder %s98, 0
      %s101 = sadd.s32 %s100, 1
      %s102 = scalar_select %p99, %s100, %s101
      %p105 = pneg %p99
      %p106 = scmp.eq.s32.totalorder %s24, 3
      %p107 = por %p105, %p106
      %p108 = scmp.ne.s32.totalorder %s100, %s103
      %p109 = scmp.eq.s32.totalorder %s24, 0
      %p110 = por %p108, %p109
      %p111 = scmp.ne.s32.totalorder %s100, %s103
      %p112 = scmp.eq.s32.totalorder %s29, 3
      %p113 = por %p111, %p112
      %p114 = scmp.ne.s32.totalorder %s103, %s104
      %p115 = scmp.eq.s32.totalorder %s29, 0
      %p116 = por %p114, %p115
      %p117 = scmp.ne.s32.totalorder %s103, %s104
      %p118 = scmp.eq.s32.totalorder %s30, 3
      %p119 = por %p117, %p118
      %p121 = scmp.ne.s32.totalorder %s104, %s120
      %p122 = scmp.eq.s32.totalorder %s30, 0
      %p123 = por %p121, %p122
      %s124 = ssub.s32 %s32, %s39
      %p125 = scmp.eq.s32.totalorder %s124, 0
      %s127 = sadd.s32 %s126, 1
      %s128 = scalar_select %p125, %s126, %s127
      %p131 = pneg %p125
      %p132 = scmp.eq.s32.totalorder %s24, 3
      %p133 = por %p131, %p132
      %p134 = scmp.ne.s32.totalorder %s126, %s129
      %p135 = scmp.eq.s32.totalorder %s24, 0
      %p136 = por %p134, %p135
      %p137 = scmp.ne.s32.totalorder %s126, %s129
      %p138 = scmp.eq.s32.totalorder %s29, 3
      %p139 = por %p137, %p138
      %p140 = scmp.ne.s32.totalorder %s129, %s130
      %p141 = scmp.eq.s32.totalorder %s29, 0
      %p142 = por %p140, %p141
      %p143 = scmp.ne.s32.totalorder %s129, %s130
      %p144 = scmp.eq.s32.totalorder %s30, 3
      %p145 = por %p143, %p144
      %p147 = scmp.ne.s32.totalorder %s130, %s146
      %p148 = scmp.eq.s32.totalorder %s30, 0
      %p149 = por %p147, %p148
      %s150 = ssub.s32 %s32, %s39
      %p151 = scmp.eq.s32.totalorder %s150, 0
      %s153 = sadd.s32 %s152, 1
      %s154 = scalar_select %p151, %s152, %s153
      %p157 = pneg %p151
      %p158 = scmp.eq.s32.totalorder %s24, 3
      %p159 = por %p157, %p158
      %p160 = scmp.ne.s32.totalorder %s152, %s155
      %p161 = scmp.eq.s32.totalorder %s24, 0
      %p162 = por %p160, %p161
      %p163 = scmp.ne.s32.totalorder %s152, %s155
      %p164 = scmp.eq.s32.totalorder %s29, 3
      %p165 = por %p163, %p164
      %p166 = scmp.ne.s32.totalorder %s155, %s156
      %p167 = scmp.eq.s32.totalorder %s29, 0
      %p168 = por %p166, %p167
      %p169 = scmp.ne.s32.totalorder %s155, %s156
      %p170 = scmp.eq.s32.totalorder %s30, 3
      %p171 = por %p169, %p170
      %p173 = scmp.ne.s32.totalorder %s156, %s172
      %p174 = scmp.eq.s32.totalorder %s30, 0
      %p175 = por %p173, %p174
      %s176 = ssub.s32 %s32, %s39
      %p177 = scmp.eq.s32.totalorder %s176, 0
      %s179 = sadd.s32 %s178, 1
      %s180 = scalar_select %p177, %s178, %s179
      %p183 = pneg %p177
      %p184 = scmp.eq.s32.totalorder %s24, 3
      %p185 = por %p183, %p184
      %p186 = scmp.ne.s32.totalorder %s178, %s181
      %p187 = scmp.eq.s32.totalorder %s24, 0
      %p188 = por %p186, %p187
      %p189 = scmp.ne.s32.totalorder %s178, %s181
      %p190 = scmp.eq.s32.totalorder %s29, 3
      %p191 = por %p189, %p190
      %p192 = scmp.ne.s32.totalorder %s181, %s182
      %p193 = scmp.eq.s32.totalorder %s29, 0
      %p194 = por %p192, %p193
      %p195 = scmp.ne.s32.totalorder %s181, %s182
      %p196 = scmp.eq.s32.totalorder %s30, 3
      %p197 = por %p195, %p196
      %p199 = scmp.ne.s32.totalorder %s182, %s198
      %p200 = scmp.eq.s32.totalorder %s30, 0
      %p201 = por %p199, %p200
      %s202 = ssub.s32 %s31, %s43
      %p203 = scmp.eq.s32.totalorder %s202, 0
      %s205 = sadd.s32 %s204, 1
      %s206 = scalar_select %p203, %s204, %s205
      %p209 = pneg %p203
      %p210 = scmp.eq.s32.totalorder %s24, 3
      %p211 = por %p209, %p210
      %p212 = scmp.ne.s32.totalorder %s204, %s207
      %p213 = scmp.eq.s32.totalorder %s24, 0
      %p214 = por %p212, %p213
      %p215 = scmp.ne.s32.totalorder %s204, %s207
      %p216 = scmp.eq.s32.totalorder %s29, 3
      %p217 = por %p215, %p216
      %p218 = scmp.ne.s32.totalorder %s207, %s208
      %p219 = scmp.eq.s32.totalorder %s29, 0
      %p220 = por %p218, %p219
      %p221 = scmp.ne.s32.totalorder %s207, %s208
      %p222 = scmp.eq.s32.totalorder %s30, 3
      %p223 = por %p221, %p222
      %p225 = scmp.ne.s32.totalorder %s208, %s224
      %p226 = scmp.eq.s32.totalorder %s30, 0
      %p227 = por %p225, %p226
      %p228 = scmp.le.s32.totalorder 1, %s24
      %p229 = scmp.lt.s32.totalorder %s24, 5
      %p230 = pnand %p228, %p229
      %p231 = pneg %p230
      // Predicated region
      $region9: #{tpu_custom_call.1} parent=5 // pred_check
        _
      $region10: #{tpu_custom_call.1} parent=5 // pred_check_branch
        %233 = sbr.rel (%p230) target = $region12
      $region11: #{tpu_custom_call.1} parent=5 // pred_region
        %s234 = ssub.s32 %s24, 1
      $region12: #{tpu_custom_call.1} parent=5 // pred_fallthru
        _
      %p235 = scmp.lt.s32.totalorder %s24, 4
      // Predicated region
      $region13: #{tpu_custom_call.1} parent=5 // pred_check
        %p236 = pneg %p235
      $region14: #{tpu_custom_call.1} parent=5 // pred_check_branch
        %238 = sbr.rel (%p236) target = $region16
      $region15: #{tpu_custom_call.1} parent=5 // pred_region
        // Predicated region
        $region17: #{tpu_custom_call.1} parent=15 // pred_check
          %p239 = pneg %p58
        $region18: #{tpu_custom_call.1} parent=15 // pred_check_branch
          %241 = sbr.rel (%p239) target = $region20
        $region19: #{tpu_custom_call.1} parent=15 // pred_region
          %s242 = sand.u32 %s48, 1
          %s243 = scalar_lea.sflag [#allocation3], %s242
          %s244 = sand.u32 %s48, 1
          %s245 = smul.addr %s244, 4
          %s246 = scalar_lea.vmem [#allocation2], %s245
          %s248 = ssub.s32 64, 64
          %249 = vsyncadd %s243, %s248
          %s250 = smul.addr %s31, 2
          %s251 = sadd.s32 %s32, %s250
          %s252 = smul.addr %s251, 64
          %s253 = scalar_lea.hbm %s0, %s252
          %s255 = sshll.u32 %s246, 4
          %s256 = int_to_ptr.vmem [resolvable:$true] %s255
          %258 = dma.hbm_to_vmem [thread:$0]  %s253, 64, %s256, %s243
        $region20: #{tpu_custom_call.1} parent=15 // pred_fallthru
          _
        // Predicated region
        $region21: #{tpu_custom_call.1} parent=15 // pred_check
          %p259 = pneg %p84
        $region22: #{tpu_custom_call.1} parent=15 // pred_check_branch
          %261 = sbr.rel (%p259) target = $region24
        $region23: #{tpu_custom_call.1} parent=15 // pred_region
          %s262 = sand.u32 %s24, 1
          %s263 = scalar_lea.sflag [#allocation6], %s262
          %s264 = sand.u32 %s74, 1
          %s265 = smul.addr %s264, 8
          %s266 = scalar_lea.vmem [#allocation5], %s265
          %s268 = ssub.s32 128, 128
          %269 = vsyncadd %s263, %s268
          %s270 = smul.addr %s31, 128
          %s271 = scalar_lea.hbm %s1, %s270
          %s273 = sshll.u32 %s266, 4
          %s274 = int_to_ptr.vmem [resolvable:$true] %s273
          %276 = dma.hbm_to_vmem [thread:$0]  %s271, 128, %s274, %s263
        $region24: #{tpu_custom_call.1} parent=15 // pred_fallthru
          _
        // Predicated region
        $region25: #{tpu_custom_call.1} parent=15 // pred_check
          %p277 = pneg %p110
        $region26: #{tpu_custom_call.1} parent=15 // pred_check_branch
          %279 = sbr.rel (%p277) target = $region28
        $region27: #{tpu_custom_call.1} parent=15 // pred_region
          %s280 = sand.u32 %s24, 1
          %s281 = scalar_lea.sflag [#allocation6], %s280
          %s282 = sand.u32 %s100, 1
          %s283 = smul.addr %s282, 48
          %s284 = scalar_lea.vmem [#allocation7], %s283
          %s286 = ssub.s32 768, 768
          %287 = vsyncadd %s281, %s286
          %s288 = smul.addr %s32, 12
          %s289 = smul.addr %s288, 64
          %s290 = scalar_lea.hbm %s2, %s289
          %s291 = sshll.u32 %s284, 4
          %s292 = int_to_ptr.vmem [resolvable:$true] %s291
          %297 = dma.hbm_to_vmem [thread:$0]  %s290, 768, %s292, %s281, 64, 64, 4
        $region28: #{tpu_custom_call.1} parent=15 // pred_fallthru
          _
        // Predicated region
        $region29: #{tpu_custom_call.1} parent=15 // pred_check
          %p298 = pneg %p136
        $region30: #{tpu_custom_call.1} parent=15 // pred_check_branch
          %300 = sbr.rel (%p298) target = $region32
        $region31: #{tpu_custom_call.1} parent=15 // pred_region
          %s301 = sand.u32 %s24, 1
          %s302 = scalar_lea.sflag [#allocation9], %s301
          %s303 = sand.u32 %s126, 1
          %s304 = smul.addr %s303, 48
          %s305 = scalar_lea.vmem [#allocation8], %s304
          %s307 = ssub.s32 768, 768
          %308 = vsyncadd %s302, %s307
          %s309 = smul.addr %s32, 12
          %s310 = smul.addr %s309, 64
          %s311 = scalar_lea.hbm %s3, %s310
          %s312 = sshll.u32 %s305, 4
          %s313 = int_to_ptr.vmem [resolvable:$true] %s312
          %318 = dma.hbm_to_vmem [thread:$0]  %s311, 768, %s313, %s302, 64, 64, 4
        $region32: #{tpu_custom_call.1} parent=15 // pred_fallthru
          _
        // Predicated region
        $region33: #{tpu_custom_call.1} parent=15 // pred_check
          %p319 = pneg %p162
        $region34: #{tpu_custom_call.1} parent=15 // pred_check_branch
          %321 = sbr.rel (%p319) target = $region36
        $region35: #{tpu_custom_call.1} parent=15 // pred_region
          %p322 = scmp.lt.s32.totalorder %s32, 1
          %s323 = scalar_select %p322, %s32, 1
          %s324 = smul.addr %s323, 3
          %s325 = scalar_lea.vmem %s4, %s324
        $region36: #{tpu_custom_call.1} parent=15 // pred_fallthru
          _
        // Predicated region
        $region37: #{tpu_custom_call.1} parent=15 // pred_check
          %p326 = pneg %p188
        $region38: #{tpu_custom_call.1} parent=15 // pred_check_branch
          %328 = sbr.rel (%p326) target = $region40
        $region39: #{tpu_custom_call.1} parent=15 // pred_region
          %s329 = sand.u32 %s24, 1
          %s330 = scalar_lea.sflag [#allocation9], %s329
          %s331 = sand.u32 %s178, 1
          %s332 = smul.addr %s331, 3
          %s333 = scalar_lea.vmem [#allocation10], %s332
          %s335 = ssub.s32 48, 48
          %336 = vsyncadd %s330, %s335
          %s337 = smul.addr %s32, 3
          %s338 = smul.addr %s337, 16
          %s339 = scalar_lea.hbm %s5, %s338
          %s340 = sshll.u32 %s333, 4
          %s341 = int_to_ptr.vmem [resolvable:$true] %s340
          %346 = dma.hbm_to_vmem [thread:$0]  %s339, 48, %s341, %s330, 16, 16, 1
        $region40: #{tpu_custom_call.1} parent=15 // pred_fallthru
          _
      $region16: #{tpu_custom_call.1} parent=5 // pred_fallthru
        _
      %p347 = scmp.le.s32.totalorder 1, %s24
      %p348 = scmp.lt.s32.totalorder %s24, 5
      %p349 = pnand %p347, %p348
      %p350 = pneg %p349
      // Predicated region
      $region41: #{tpu_custom_call.1} parent=5 // pred_check
        _
      $region42: #{tpu_custom_call.1} parent=5 // pred_check_branch
        %352 = sbr.rel (%p349) target = $region44
      $region43: #{tpu_custom_call.1} parent=5 // pred_region
        %s353 = ssub.s32 %s24, 1
        %s354 = sand.u32 %s51, 1
        %s355 = scalar_lea.sflag [#allocation3], %s354
        %s356 = sand.u32 %s51, 1
        %s357 = smul.addr %s356, 4
        %s358 = scalar_lea.vmem [#allocation2], %s357
        // Predicated region
        $region45: #{tpu_custom_call.1} parent=43 // pred_check
          %p359 = pneg %p64
        $region46: #{tpu_custom_call.1} parent=43 // pred_check_branch
          %361 = sbr.rel (%p359) target = $region48
        $region47: #{tpu_custom_call.1} parent=43 // pred_region
          %362 = dma.done %s355, 64
        $region48: #{tpu_custom_call.1} parent=43 // pred_fallthru
          _
        %s363 = sand.u32 %s29, 1
        %s364 = scalar_lea.sflag [#allocation6], %s363
        %s365 = sand.u32 %s77, 1
        %s366 = smul.addr %s365, 8
        %s367 = scalar_lea.vmem [#allocation5], %s366
        // Predicated region
        $region49: #{tpu_custom_call.1} parent=43 // pred_check
          %p368 = pneg %p90
        $region50: #{tpu_custom_call.1} parent=43 // pred_check_branch
          %370 = sbr.rel (%p368) target = $region52
        $region51: #{tpu_custom_call.1} parent=43 // pred_region
          %371 = dma.done %s364, 128
        $region52: #{tpu_custom_call.1} parent=43 // pred_fallthru
          _
        %s372 = sand.u32 %s29, 1
        %s373 = scalar_lea.sflag [#allocation6], %s372
        %s374 = sand.u32 %s103, 1
        %s375 = smul.addr %s374, 48
        %s376 = scalar_lea.vmem [#allocation7], %s375
        // Predicated region
        $region53: #{tpu_custom_call.1} parent=43 // pred_check
          %p377 = pneg %p116
        $region54: #{tpu_custom_call.1} parent=43 // pred_check_branch
          %379 = sbr.rel (%p377) target = $region56
        $region55: #{tpu_custom_call.1} parent=43 // pred_region
          %380 = dma.done %s373, 768
        $region56: #{tpu_custom_call.1} parent=43 // pred_fallthru
          _
        %s381 = sand.u32 %s29, 1
        %s382 = scalar_lea.sflag [#allocation9], %s381
        %s383 = sand.u32 %s129, 1
        %s384 = smul.addr %s383, 48
        %s385 = scalar_lea.vmem [#allocation8], %s384
        // Predicated region
        $region57: #{tpu_custom_call.1} parent=43 // pred_check
          %p386 = pneg %p142
        $region58: #{tpu_custom_call.1} parent=43 // pred_check_branch
          %388 = sbr.rel (%p386) target = $region60
        $region59: #{tpu_custom_call.1} parent=43 // pred_region
          %389 = dma.done %s382, 768
        $region60: #{tpu_custom_call.1} parent=43 // pred_fallthru
          _
        %s390 = sand.u32 %s29, 1
        %s391 = scalar_lea.sflag [#allocation9], %s390
        %s392 = sand.u32 %s181, 1
        %s393 = smul.addr %s392, 3
        %s394 = scalar_lea.vmem [#allocation10], %s393
        // Predicated region
        $region61: #{tpu_custom_call.1} parent=43 // pred_check
          %p395 = pneg %p194
        $region62: #{tpu_custom_call.1} parent=43 // pred_check_branch
          %397 = sbr.rel (%p395) target = $region64
        $region63: #{tpu_custom_call.1} parent=43 // pred_region
          %398 = dma.done %s391, 48
        $region64: #{tpu_custom_call.1} parent=43 // pred_fallthru
          _
        %s399 = sand.u32 %s51, 1
        %s400 = scalar_lea.sflag [#allocation3], %s399
        %s401 = sand.u32 %s51, 1
        %s402 = smul.addr %s401, 4
        %s403 = scalar_lea.vmem [#allocation2], %s402
        %p404 = pneg %p64
        %p405 = pneg %p61
        %s406 = sand.u32 %s29, 1
        %s407 = scalar_lea.sflag [#allocation6], %s406
        %s408 = sand.u32 %s77, 1
        %s409 = smul.addr %s408, 8
        %s410 = scalar_lea.vmem [#allocation5], %s409
        %p411 = pneg %p90
        %p412 = pneg %p87
        %s413 = sand.u32 %s29, 1
        %s414 = scalar_lea.sflag [#allocation6], %s413
        %s415 = sand.u32 %s103, 1
        %s416 = smul.addr %s415, 48
        %s417 = scalar_lea.vmem [#allocation7], %s416
        %p418 = pneg %p116
        %p419 = pneg %p113
        %s420 = sand.u32 %s29, 1
        %s421 = scalar_lea.sflag [#allocation9], %s420
        %s422 = sand.u32 %s129, 1
        %s423 = smul.addr %s422, 48
        %s424 = scalar_lea.vmem [#allocation8], %s423
        %p425 = pneg %p142
        %p426 = pneg %p139
        %p427 = scmp.lt.s32.totalorder %s34, 1
        %s428 = scalar_select %p427, %s34, 1
        %s429 = smul.addr %s428, 3
        %s430 = scalar_lea.vmem %s4, %s429
        %p431 = pneg %p168
        %p432 = pneg %p165
        %s433 = sand.u32 %s29, 1
        %s434 = scalar_lea.sflag [#allocation9], %s433
        %s435 = sand.u32 %s181, 1
        %s436 = smul.addr %s435, 3
        %s437 = scalar_lea.vmem [#allocation10], %s436
        %p438 = pneg %p194
        %p439 = pneg %p191
        %p440 = pneg %p220
        %p441 = pneg %p217
        %s442 = sand.u32 %s207, 1
        %s443 = scalar_lea.sflag [#allocation4], %s442
        %s444 = sand.u32 %s207, 1
        %s445 = smul.addr %s444, 8
        %s446 = scalar_lea.vmem [#allocation11], %s445
        %p447 = scmp.lt.s32.totalorder %s34, 1
        %s448 = scalar_select %p447, %s34, 1
        %s449 = smul.addr %s448, 3
        %s450 = scalar_lea.vmem %s4, %s449
        %p452 = scmp.eq.s32.totalorder %s34, 0
        // Predicated region
        $region65: #{tpu_custom_call.1} parent=43 // pred_check
          %p453 = pneg %p452
        $region66: #{tpu_custom_call.1} parent=43 // pred_check_branch
          %455 = sbr.rel (%p453) target = $region68
        $region67: #{tpu_custom_call.1} parent=43 // pred_region
          %v456 = vld [vmem:[%s367] sm:$0xff]
          %vm457 = vcmask 261120
          %458 = vst.msk [vmem:[%s446] sm:$0xff] %vm457, %v456
        $region68: #{tpu_custom_call.1} parent=43 // pred_fallthru
          _
        %v459 = vld [vmem:[%s446] sm:$0xff]
        %v460 = vld [vmem:[%s358] sm:$0xf]
        %v461 = vpack.c.bf16 %v459, %v459
        %vm462 = vcmask 64512
        %v464 = vsel %vm462, %v460, 0
        %vm466 = vcmask 1043456
        %v468 = vsel %vm466, %v461, 0
        %470 = vmatprep.subr.bf16.mxu0 0
        %471 = vmatpush1.bf16.msra.mxu0 0
        %472 = vmatprep.subr.bf16.mxu0 0
        %473 = vmatpush1.bf16.msra.mxu0 0
        %474 = vmatprep.subr.bf16.mxu0 0
        %475 = vmatpush1.bf16.msra.mxu0 0
        %476 = vmatprep.subr.bf16.mxu0 0
        %477 = vmatpush1.bf16.msra.mxu0 0
        %478 = vmatprep.subr.bf16.mxu0 0
        %479 = vmatpush1.bf16.msra.mxu0 0
        %480 = vmatprep.subr.bf16.mxu0 0
        %481 = vmatpush1.bf16.msra.mxu0 0
        %482 = vmatprep.subr.bf16.mxu0 0
        %483 = vmatpush1.bf16.msra.mxu0 0
        %484 = vmatprep.subr.bf16.mxu0 0
        %485 = vmatpush1.bf16.msra.mxu0 %v468
        %486 = vmatprep.subr.bf16.mxu0 0
        %487 = vmatpush2.bf16.msra.mxu0 0
        %488 = vmatprep.subr.bf16.mxu0 0
        %489 = vmatpush2.bf16.msra.mxu0 0
        %490 = vmatprep.subr.bf16.mxu0 0
        %491 = vmatpush2.bf16.msra.mxu0 0
        %492 = vmatprep.subr.bf16.mxu0 0
        %493 = vmatpush2.bf16.msra.mxu0 0
        %494 = vmatprep.subr.bf16.mxu0 0
        %495 = vmatpush2.bf16.msra.mxu0 0
        %496 = vmatprep.subr.bf16.mxu0 0
        %497 = vmatpush2.bf16.msra.mxu0 0
        %498 = vmatprep.subr.bf16.mxu0 0
        %499 = vmatpush2.bf16.msra.mxu0 0
        %500 = vmatprep.subr.bf16.mxu0 0
        %501 = vmatpush2.bf16.msra.mxu0 0
        %502 = vmatprep.mubr.bf16.mxu0 0
        %503 = vmatmul.mubr.bf16.gmra.mxu0 %v464
        %v504 = vpop.f32.mrf.mxu0
        %v505 = vadd.f32 0.0, %v504
        %v506 = vpop.f32.mrf.mxu0
        %v507 = vpop.f32.mrf.mxu0
        %v508 = vpop.f32.mrf.mxu0
        %509 = vdwg.mxu0
        %v510 = vld [vmem:[%s376] sm:$0xf]
        %v511 = vld [vmem:[%s376 + $0x4] sm:$0xf]
        %v512 = vld [vmem:[%s376 + $0x8] sm:$0xf]
        %v513 = vld [vmem:[%s376 + $0xc] sm:$0xf]
        %v514 = vld [vmem:[%s376 + $0x10] sm:$0xf]
        %v515 = vld [vmem:[%s376 + $0x14] sm:$0xf]
        %v516 = vld [vmem:[%s376 + $0x18] sm:$0xf]
        %v517 = vld [vmem:[%s376 + $0x1c] sm:$0xf]
        %v518 = vld [vmem:[%s376 + $0x20] sm:$0xf]
        %v519 = vld [vmem:[%s376 + $0x24] sm:$0xf]
        %v520 = vld [vmem:[%s376 + $0x28] sm:$0xf]
        %v521 = vld [vmem:[%s376 + $0x2c] sm:$0xf]
        %v522 = vld [vmem:[%s385] sm:$0xf]
        %v523 = vld [vmem:[%s385 + $0x4] sm:$0xf]
        %v524 = vld [vmem:[%s385 + $0x8] sm:$0xf]
        %v525 = vld [vmem:[%s385 + $0xc] sm:$0xf]
        %v526 = vld [vmem:[%s385 + $0x10] sm:$0xf]
        %v527 = vld [vmem:[%s385 + $0x14] sm:$0xf]
        %v528 = vld [vmem:[%s385 + $0x18] sm:$0xf]
        %v529 = vld [vmem:[%s385 + $0x1c] sm:$0xf]
        %v530 = vld [vmem:[%s385 + $0x20] sm:$0xf]
        %v531 = vld [vmem:[%s385 + $0x24] sm:$0xf]
        %v532 = vld [vmem:[%s385 + $0x28] sm:$0xf]
        %v533 = vld [vmem:[%s385 + $0x2c] sm:$0xf]
        %v534 = vld [vmem:[%s450] sm:$0x1]
        %v535 = vld [vmem:[%s450 + $0x1] sm:$0x1]
        %v536 = vld [vmem:[%s450 + $0x2] sm:$0x1]
        %v537 = vld [vmem:[%s394] sm:$0x1]
        %v538 = vld [vmem:[%s394 + $0x1] sm:$0x1]
        %v539 = vld [vmem:[%s394 + $0x2] sm:$0x1]
        %v540 = vpack.c.bf16 %v505, %v505
        %v542 = vlaneseq
        %v543 = vshrl.u32 %v542, 7
        %v544 = vsub.s32 0, %v543
        %v545 = vrot.slane %v534, %v544
        %v551 = vunpack.c.l.b16 %v510
        %v552 = vunpack.c.l.b16 %v511
        %v553 = vunpack.c.l.b16 %v512
        %v554 = vunpack.c.l.b16 %v513
        %v555 = vpack.c.b16 %v552, %v551
        %v556 = vpack.c.b16 %v554, %v553
        %vm559 = vcmask 261120
        %v561 = vsel %vm559, %v540, 0
        %563 = vmatprep.subr.bf16.mxu0 0
        %564 = vmatpush1.bf16.msra.mxu0 0
        %565 = vmatprep.subr.bf16.mxu0 0
        %566 = vmatpush1.bf16.msra.mxu0 0
        %567 = vmatprep.subr.bf16.mxu0 0
        %568 = vmatpush1.bf16.msra.mxu0 0
        %569 = vmatprep.subr.bf16.mxu0 0
        %570 = vmatpush1.bf16.msra.mxu0 0
        %571 = vmatprep.subr.bf16.mxu0 0
        %572 = vmatpush1.bf16.msra.mxu0 0
        %573 = vmatprep.subr.bf16.mxu0 0
        %574 = vmatpush1.bf16.msra.mxu0 0
        %575 = vmatprep.subr.bf16.mxu0 0
        %576 = vmatpush1.bf16.msra.mxu0 %v556
        %577 = vmatprep.subr.bf16.mxu0 0
        %578 = vmatpush1.bf16.msra.mxu0 %v555
        %579 = vmatprep.subr.bf16.mxu0 0
        %580 = vmatpush2.bf16.msra.mxu0 0
        %581 = vmatprep.subr.bf16.mxu0 0
        %582 = vmatpush2.bf16.msra.mxu0 0
        %583 = vmatprep.subr.bf16.mxu0 0
        %584 = vmatpush2.bf16.msra.mxu0 0
        %585 = vmatprep.subr.bf16.mxu0 0
        %586 = vmatpush2.bf16.msra.mxu0 0
        %587 = vmatprep.subr.bf16.mxu0 0
        %588 = vmatpush2.bf16.msra.mxu0 0
        %589 = vmatprep.subr.bf16.mxu0 0
        %590 = vmatpush2.bf16.msra.mxu0 0
        %591 = vmatprep.subr.bf16.mxu0 0
        %592 = vmatpush2.bf16.msra.mxu0 0
        %593 = vmatprep.subr.bf16.mxu0 0
        %594 = vmatpush2.bf16.msra.mxu0 0
        %595 = vmatprep.mubr.bf16.mxu0 0
        %596 = vmatmul.mubr.bf16.gmra.mxu0 %v561
        %v597 = vpop.f32.mrf.mxu0
        %v598 = vadd.f32 %v545, %v597
        %v599 = vpop.f32.mrf.mxu0
        %v600 = vpop.f32.mrf.mxu0
        %v601 = vpop.f32.mrf.mxu0
        %602 = vdwg.mxu0
        %v604 = vlaneseq
        %v605 = vshrl.u32 %v604, 7
        %v606 = vsub.s32 0, %v605
        %v607 = vrot.slane %v537, %v606
        %v613 = vunpack.c.l.b16 %v522
        %v614 = vunpack.c.l.b16 %v523
        %v615 = vunpack.c.l.b16 %v524
        %v616 = vunpack.c.l.b16 %v525
        %v617 = vpack.c.b16 %v614, %v613
        %v618 = vpack.c.b16 %v616, %v615
        %v621 = vsel %vm559, %v461, 0
        %623 = vmatprep.subr.bf16.mxu0 0
        %624 = vmatpush1.bf16.msra.mxu0 0
        %625 = vmatprep.subr.bf16.mxu0 0
        %626 = vmatpush1.bf16.msra.mxu0 0
        %627 = vmatprep.subr.bf16.mxu0 0
        %628 = vmatpush1.bf16.msra.mxu0 0
        %629 = vmatprep.subr.bf16.mxu0 0
        %630 = vmatpush1.bf16.msra.mxu0 0
        %631 = vmatprep.subr.bf16.mxu0 0
        %632 = vmatpush1.bf16.msra.mxu0 0
        %633 = vmatprep.subr.bf16.mxu0 0
        %634 = vmatpush1.bf16.msra.mxu0 0
        %635 = vmatprep.subr.bf16.mxu0 0
        %636 = vmatpush1.bf16.msra.mxu0 %v618
        %637 = vmatprep.subr.bf16.mxu0 0
        %638 = vmatpush1.bf16.msra.mxu0 %v617
        %639 = vmatprep.subr.bf16.mxu0 0
        %640 = vmatpush2.bf16.msra.mxu0 0
        %641 = vmatprep.subr.bf16.mxu0 0
        %642 = vmatpush2.bf16.msra.mxu0 0
        %643 = vmatprep.subr.bf16.mxu0 0
        %644 = vmatpush2.bf16.msra.mxu0 0
        %645 = vmatprep.subr.bf16.mxu0 0
        %646 = vmatpush2.bf16.msra.mxu0 0
        %647 = vmatprep.subr.bf16.mxu0 0
        %648 = vmatpush2.bf16.msra.mxu0 0
        %649 = vmatprep.subr.bf16.mxu0 0
        %650 = vmatpush2.bf16.msra.mxu0 0
        %651 = vmatprep.subr.bf16.mxu0 0
        %652 = vmatpush2.bf16.msra.mxu0 0
        %653 = vmatprep.subr.bf16.mxu0 0
        %654 = vmatpush2.bf16.msra.mxu0 0
        %655 = vmatprep.mubr.bf16.mxu0 0
        %656 = vmatmul.mubr.bf16.gmra.mxu0 %v621
        %v657 = vpop.f32.mrf.mxu0
        %v658 = vadd.f32 %v607, %v657
        %v659 = vpop.f32.mrf.mxu0
        %v660 = vpop.f32.mrf.mxu0
        %v661 = vpop.f32.mrf.mxu0
        %662 = vdwg.mxu0
        %v663 = vadd.f32 %v598, %v658
        %v664 = vxor.u32 %v663, 2147483648
        %v665 = vmul.f32 %v664, 1.442695
        %v666 = vpow.pop %v665
        %v667 = vadd.f32 %v666, 1.0
        %v668 = vrcp.pop %v667
        %v669 = vmul.f32 1.0, %v668
        %v671 = vlaneseq
        %v672 = vshrl.u32 %v671, 7
        %v673 = vsub.s32 0, %v672
        %v674 = vrot.slane %v535, %v673
        %v680 = vunpack.c.l.b16 %v514
        %v681 = vunpack.c.l.b16 %v515
        %v682 = vunpack.c.l.b16 %v516
        %v683 = vunpack.c.l.b16 %v517
        %v684 = vpack.c.b16 %v681, %v680
        %v685 = vpack.c.b16 %v683, %v682
        %688 = vmatprep.subr.bf16.mxu0 0
        %689 = vmatpush1.bf16.msra.mxu0 0
        %690 = vmatprep.subr.bf16.mxu0 0
        %691 = vmatpush1.bf16.msra.mxu0 0
        %692 = vmatprep.subr.bf16.mxu0 0
        %693 = vmatpush1.bf16.msra.mxu0 0
        %694 = vmatprep.subr.bf16.mxu0 0
        %695 = vmatpush1.bf16.msra.mxu0 0
        %696 = vmatprep.subr.bf16.mxu0 0
        %697 = vmatpush1.bf16.msra.mxu0 0
        %698 = vmatprep.subr.bf16.mxu0 0
        %699 = vmatpush1.bf16.msra.mxu0 0
        %700 = vmatprep.subr.bf16.mxu0 0
        %701 = vmatpush1.bf16.msra.mxu0 %v685
        %702 = vmatprep.subr.bf16.mxu0 0
        %703 = vmatpush1.bf16.msra.mxu0 %v684
        %704 = vmatprep.subr.bf16.mxu0 0
        %705 = vmatpush2.bf16.msra.mxu0 0
        %706 = vmatprep.subr.bf16.mxu0 0
        %707 = vmatpush2.bf16.msra.mxu0 0
        %708 = vmatprep.subr.bf16.mxu0 0
        %709 = vmatpush2.bf16.msra.mxu0 0
        %710 = vmatprep.subr.bf16.mxu0 0
        %711 = vmatpush2.bf16.msra.mxu0 0
        %712 = vmatprep.subr.bf16.mxu0 0
        %713 = vmatpush2.bf16.msra.mxu0 0
        %714 = vmatprep.subr.bf16.mxu0 0
        %715 = vmatpush2.bf16.msra.mxu0 0
        %716 = vmatprep.subr.bf16.mxu0 0
        %717 = vmatpush2.bf16.msra.mxu0 0
        %718 = vmatprep.subr.bf16.mxu0 0
        %719 = vmatpush2.bf16.msra.mxu0 0
        %720 = vmatprep.mubr.bf16.mxu0 0
        %721 = vmatmul.mubr.bf16.gmra.mxu0 %v561
        %v722 = vpop.f32.mrf.mxu0
        %v723 = vadd.f32 %v674, %v722
        %v724 = vpop.f32.mrf.mxu0
        %v725 = vpop.f32.mrf.mxu0
        %v726 = vpop.f32.mrf.mxu0
        %727 = vdwg.mxu0
        %v729 = vlaneseq
        %v730 = vshrl.u32 %v729, 7
        %v731 = vsub.s32 0, %v730
        %v732 = vrot.slane %v538, %v731
        %v738 = vunpack.c.l.b16 %v526
        %v739 = vunpack.c.l.b16 %v527
        %v740 = vunpack.c.l.b16 %v528
        %v741 = vunpack.c.l.b16 %v529
        %v742 = vpack.c.b16 %v739, %v738
        %v743 = vpack.c.b16 %v741, %v740
        %746 = vmatprep.subr.bf16.mxu0 0
        %747 = vmatpush1.bf16.msra.mxu0 0
        %748 = vmatprep.subr.bf16.mxu0 0
        %749 = vmatpush1.bf16.msra.mxu0 0
        %750 = vmatprep.subr.bf16.mxu0 0
        %751 = vmatpush1.bf16.msra.mxu0 0
        %752 = vmatprep.subr.bf16.mxu0 0
        %753 = vmatpush1.bf16.msra.mxu0 0
        %754 = vmatprep.subr.bf16.mxu0 0
        %755 = vmatpush1.bf16.msra.mxu0 0
        %756 = vmatprep.subr.bf16.mxu0 0
        %757 = vmatpush1.bf16.msra.mxu0 0
        %758 = vmatprep.subr.bf16.mxu0 0
        %759 = vmatpush1.bf16.msra.mxu0 %v743
        %760 = vmatprep.subr.bf16.mxu0 0
        %761 = vmatpush1.bf16.msra.mxu0 %v742
        %762 = vmatprep.subr.bf16.mxu0 0
        %763 = vmatpush2.bf16.msra.mxu0 0
        %764 = vmatprep.subr.bf16.mxu0 0
        %765 = vmatpush2.bf16.msra.mxu0 0
        %766 = vmatprep.subr.bf16.mxu0 0
        %767 = vmatpush2.bf16.msra.mxu0 0
        %768 = vmatprep.subr.bf16.mxu0 0
        %769 = vmatpush2.bf16.msra.mxu0 0
        %770 = vmatprep.subr.bf16.mxu0 0
        %771 = vmatpush2.bf16.msra.mxu0 0
        %772 = vmatprep.subr.bf16.mxu0 0
        %773 = vmatpush2.bf16.msra.mxu0 0
        %774 = vmatprep.subr.bf16.mxu0 0
        %775 = vmatpush2.bf16.msra.mxu0 0
        %776 = vmatprep.subr.bf16.mxu0 0
        %777 = vmatpush2.bf16.msra.mxu0 0
        %778 = vmatprep.mubr.bf16.mxu0 0
        %779 = vmatmul.mubr.bf16.gmra.mxu0 %v621
        %v780 = vpop.f32.mrf.mxu0
        %v781 = vadd.f32 %v732, %v780
        %v782 = vpop.f32.mrf.mxu0
        %v783 = vpop.f32.mrf.mxu0
        %v784 = vpop.f32.mrf.mxu0
        %785 = vdwg.mxu0
        %v786 = vadd.f32 %v723, %v781
        %v787 = vxor.u32 %v786, 2147483648
        %v788 = vmul.f32 %v787, 1.442695
        %v789 = vpow.pop %v788
        %v790 = vadd.f32 %v789, 1.0
        %v791 = vrcp.pop %v790
        %v792 = vmul.f32 1.0, %v791
        %v794 = vlaneseq
        %v795 = vshrl.u32 %v794, 7
        %v796 = vsub.s32 0, %v795
        %v797 = vrot.slane %v536, %v796
        %v803 = vunpack.c.l.b16 %v518
        %v804 = vunpack.c.l.b16 %v519
        %v805 = vunpack.c.l.b16 %v520
        %v806 = vunpack.c.l.b16 %v521
        %v807 = vpack.c.b16 %v804, %v803
        %v808 = vpack.c.b16 %v806, %v805
        %811 = vmatprep.subr.bf16.mxu0 0
        %812 = vmatpush1.bf16.msra.mxu0 0
        %813 = vmatprep.subr.bf16.mxu0 0
        %814 = vmatpush1.bf16.msra.mxu0 0
        %815 = vmatprep.subr.bf16.mxu0 0
        %816 = vmatpush1.bf16.msra.mxu0 0
        %817 = vmatprep.subr.bf16.mxu0 0
        %818 = vmatpush1.bf16.msra.mxu0 0
        %819 = vmatprep.subr.bf16.mxu0 0
        %820 = vmatpush1.bf16.msra.mxu0 0
        %821 = vmatprep.subr.bf16.mxu0 0
        %822 = vmatpush1.bf16.msra.mxu0 0
        %823 = vmatprep.subr.bf16.mxu0 0
        %824 = vmatpush1.bf16.msra.mxu0 %v808
        %825 = vmatprep.subr.bf16.mxu0 0
        %826 = vmatpush1.bf16.msra.mxu0 %v807
        %827 = vmatprep.subr.bf16.mxu0 0
        %828 = vmatpush2.bf16.msra.mxu0 0
        %829 = vmatprep.subr.bf16.mxu0 0
        %830 = vmatpush2.bf16.msra.mxu0 0
        %831 = vmatprep.subr.bf16.mxu0 0
        %832 = vmatpush2.bf16.msra.mxu0 0
        %833 = vmatprep.subr.bf16.mxu0 0
        %834 = vmatpush2.bf16.msra.mxu0 0
        %835 = vmatprep.subr.bf16.mxu0 0
        %836 = vmatpush2.bf16.msra.mxu0 0
        %837 = vmatprep.subr.bf16.mxu0 0
        %838 = vmatpush2.bf16.msra.mxu0 0
        %839 = vmatprep.subr.bf16.mxu0 0
        %840 = vmatpush2.bf16.msra.mxu0 0
        %841 = vmatprep.subr.bf16.mxu0 0
        %842 = vmatpush2.bf16.msra.mxu0 0
        %843 = vmatprep.mubr.bf16.mxu0 0
        %844 = vmatmul.mubr.bf16.gmra.mxu0 %v561
        %v845 = vpop.f32.mrf.mxu0
        %v846 = vadd.f32 %v797, %v845
        %v847 = vpop.f32.mrf.mxu0
        %v848 = vpop.f32.mrf.mxu0
        %v849 = vpop.f32.mrf.mxu0
        %850 = vdwg.mxu0
        %v852 = vlaneseq
        %v853 = vshrl.u32 %v852, 7
        %v854 = vsub.s32 0, %v853
        %v855 = vrot.slane %v539, %v854
        %v861 = vunpack.c.l.b16 %v530
        %v862 = vunpack.c.l.b16 %v531
        %v863 = vunpack.c.l.b16 %v532
        %v864 = vunpack.c.l.b16 %v533
        %v865 = vpack.c.b16 %v862, %v861
        %v866 = vpack.c.b16 %v864, %v863
        %869 = vmatprep.subr.bf16.mxu0 0
        %870 = vmatpush1.bf16.msra.mxu0 0
        %871 = vmatprep.subr.bf16.mxu0 0
        %872 = vmatpush1.bf16.msra.mxu0 0
        %873 = vmatprep.subr.bf16.mxu0 0
        %874 = vmatpush1.bf16.msra.mxu0 0
        %875 = vmatprep.subr.bf16.mxu0 0
        %876 = vmatpush1.bf16.msra.mxu0 0
        %877 = vmatprep.subr.bf16.mxu0 0
        %878 = vmatpush1.bf16.msra.mxu0 0
        %879 = vmatprep.subr.bf16.mxu0 0
        %880 = vmatpush1.bf16.msra.mxu0 0
        %881 = vmatprep.subr.bf16.mxu0 0
        %882 = vmatpush1.bf16.msra.mxu0 %v866
        %883 = vmatprep.subr.bf16.mxu0 0
        %884 = vmatpush1.bf16.msra.mxu0 %v865
        %885 = vmatprep.subr.bf16.mxu0 0
        %886 = vmatpush2.bf16.msra.mxu0 0
        %887 = vmatprep.subr.bf16.mxu0 0
        %888 = vmatpush2.bf16.msra.mxu0 0
        %889 = vmatprep.subr.bf16.mxu0 0
        %890 = vmatpush2.bf16.msra.mxu0 0
        %891 = vmatprep.subr.bf16.mxu0 0
        %892 = vmatpush2.bf16.msra.mxu0 0
        %893 = vmatprep.subr.bf16.mxu0 0
        %894 = vmatpush2.bf16.msra.mxu0 0
        %895 = vmatprep.subr.bf16.mxu0 0
        %896 = vmatpush2.bf16.msra.mxu0 0
        %897 = vmatprep.subr.bf16.mxu0 0
        %898 = vmatpush2.bf16.msra.mxu0 0
        %899 = vmatprep.subr.bf16.mxu0 0
        %900 = vmatpush2.bf16.msra.mxu0 0
        %901 = vmatprep.mubr.bf16.mxu0 0
        %902 = vmatmul.mubr.bf16.gmra.mxu0 %v621
        %v903 = vpop.f32.mrf.mxu0
        %v904 = vadd.f32 %v855, %v903
        %v905 = vpop.f32.mrf.mxu0
        %v906 = vpop.f32.mrf.mxu0
        %v907 = vpop.f32.mrf.mxu0
        %908 = vdwg.mxu0
        %v909 = vmul.f32 %v669, %v904
        %v910 = vadd.f32 %v846, %v909
        %v911 = vtanh.pop %v910
        %v912 = vsub.f32 1.0, %v792
        %v913 = vmul.f32 %v912, %v911
        %v914 = vmul.f32 %v792, %v459
        %v915 = vadd.f32 %v913, %v914
        %916 = vst.msk [vmem:[%s446] sm:$0xff] %vm559, %v915
        %s917 = sand.u32 %s207, 1
        %s918 = scalar_lea.sflag [#allocation4], %s917
        %s919 = sand.u32 %s207, 1
        %s920 = smul.addr %s919, 8
        %s921 = scalar_lea.vmem [#allocation11], %s920
        // Predicated region
        $region69: #{tpu_custom_call.1} parent=43 // pred_check
          %p922 = pneg %p217
        $region70: #{tpu_custom_call.1} parent=43 // pred_check_branch
          %924 = sbr.rel (%p922) target = $region72
        $region71: #{tpu_custom_call.1} parent=43 // pred_region
          %s926 = ssub.s32 128, 128
          %927 = vsyncadd %s918, %s926
          %s928 = smul.addr %s33, 128
          %s929 = scalar_lea.hbm %s6, %s928
          %s931 = sshll.u32 %s921, 4
          %s932 = int_to_ptr.vmem [resolvable:$true] %s931
          %934 = dma.vmem_to_hbm [thread:$0]  %s932, 128, %s929, %s918
        $region72: #{tpu_custom_call.1} parent=43 // pred_fallthru
          _
      $region44: #{tpu_custom_call.1} parent=5 // pred_fallthru
        _
      %p935 = scmp.le.s32.totalorder 2, %s24
      // Predicated region
      $region73: #{tpu_custom_call.1} parent=5 // pred_check
        %p936 = pneg %p935
      $region74: #{tpu_custom_call.1} parent=5 // pred_check_branch
        %938 = sbr.rel (%p936) target = $region76
      $region75: #{tpu_custom_call.1} parent=5 // pred_region
        %s939 = ssub.s32 %s24, 2
        // Predicated region
        $region77: #{tpu_custom_call.1} parent=75 // pred_check
          %p940 = pneg %p223
        $region78: #{tpu_custom_call.1} parent=75 // pred_check_branch
          %942 = sbr.rel (%p940) target = $region80
        $region79: #{tpu_custom_call.1} parent=75 // pred_region
          %s943 = sand.u32 %s208, 1
          %s944 = scalar_lea.sflag [#allocation4], %s943
          %s945 = sand.u32 %s208, 1
          %s946 = smul.addr %s945, 8
          %s947 = scalar_lea.vmem [#allocation11], %s946
          %948 = dma.done %s944, 128
        $region80: #{tpu_custom_call.1} parent=75 // pred_fallthru
          _
      $region76: #{tpu_custom_call.1} parent=5 // pred_fallthru
        _
    $region6: #{tpu_custom_call.1} parent=1 // loop_footer
      %s28 = sadd.s32 1, %s24
    $region7: #{tpu_custom_call.1} parent=1 // loop_footer_branch
      %23 = sbr.rel target = $region3
    $region8: #{tpu_custom_call.1} parent=1 // loop_exit
      _
    %949 = vsyncpa [#allocation3], 1
    %s950 = scalar_lea.sflag [#allocation3], 1
    %951 = vsyncpa %s950, 1
    %952 = vsyncpa [#allocation6], 1
    %s953 = scalar_lea.sflag [#allocation6], 1
    %954 = vsyncpa %s953, 1
    %955 = vsyncpa [#allocation9], 1
    %s956 = scalar_lea.sflag [#allocation9], 1
    %957 = vsyncpa %s956, 1
    %958 = vsyncpa [#allocation4], 1
    %s959 = scalar_lea.sflag [#allocation4], 1
    %960 = vsyncpa %s959, 1

</llo_original>
